<compile_context>
chip_gen: v7x
topology: tpu7x:2x2x1
jax: 0.10.0
libtpu: 0.0.40
codegen_flags: <defaults>
</compile_context>

<pallas_src>
import functools

import numpy as np
import jax
import jax.numpy as jnp
from jax import lax
from jax.experimental import pallas as pl
from jax.experimental.pallas import tpu as pltpu


def _backproject_kernel(width, invk_ref, depth_ref, out_ref):
    # invk_ref : SMEM (B*16,)  row-major flattened inv_K matrices
    # depth_ref: VMEM (1, T)   flattened depth tile
    # out_ref  : VMEM (4, T)   cam_points tile
    b = pl.program_id(0)
    t = pl.program_id(1)
    T = out_ref.shape[1]

    base = b * 16
    k00 = invk_ref[base + 0]
    k01 = invk_ref[base + 1]
    k02 = invk_ref[base + 2]
    k10 = invk_ref[base + 4]
    k11 = invk_ref[base + 5]
    k12 = invk_ref[base + 6]
    k20 = invk_ref[base + 8]
    k21 = invk_ref[base + 9]
    k22 = invk_ref[base + 10]

    w_f = jnp.float32(width)

    # Flattened pixel index for this tile (exact in f32 for HW < 2^24 pixels).
    lane = lax.broadcasted_iota(jnp.int32, (1, T), 1).astype(jnp.float32)
    idx = lane + (t * T).astype(jnp.float32)

    # x = idx % W, y = idx // W, entirely on the VPU:
    # float divide-by-constant approximation followed by an exact +-1 fixup.
    y = jnp.floor(idx * jnp.float32(1.0 / width))
    x = idx - y * w_f
    y = jnp.where(x < 0.0, y - 1.0, y)
    x = jnp.where(x < 0.0, x + w_f, x)
    y = jnp.where(x >= w_f, y + 1.0, y)
    x = jnp.where(x >= w_f, x - w_f, x)

    d = depth_ref[...]                                    # (1, T)
    out_ref[0:1, :] = (k00 * x + k01 * y + k02) * d
    out_ref[1:2, :] = (k10 * x + k11 * y + k12) * d
    out_ref[2:3, :] = (k20 * x + k21 * y + k22) * d
    out_ref[3:4, :] = jnp.ones_like(d)


def _pick_tile(hw, max_tile):
    """Largest lane tile <= max_tile that is a multiple of 128 and divides HW."""
    if hw <= max_tile:
        return hw                       # full-extent block (always legal)
    for cand in range(max_tile - max_tile % 128, 0, -128):
        if hw % cand == 0:
            return cand
    # TODO(synk): pad HW to a 128-multiple when no aligned tile divides it.
    return hw


def backproject_depth(depth, inv_K, *, max_tile=8192):
    """depth: [B, 1, H, W] f32, inv_K: [B, 4, 4] f32 -> [B, 4, H*W] f32."""
    B, _, H, W = depth.shape
    HW = H * W
    depth_flat = depth.reshape(B, 1, HW).astype(jnp.float32)
    invk_flat = inv_K.reshape(B * 16).astype(jnp.float32)

    tile = _pick_tile(HW, max_tile)
    grid = (B, HW // tile)

    kernel = functools.partial(_backproject_kernel, W)

    return pl.pallas_call(
        kernel,
        out_shape=jax.ShapeDtypeStruct((B, 4, HW), jnp.float32),
        grid_spec=pltpu.PrefetchScalarGridSpec(
            num_scalar_prefetch=1,      # inv_K lives in SMEM, read as scalars
            grid=grid,
            in_specs=[
                # depth: squeeze batch, (1, tile) lane-major block
                pl.BlockSpec((None, 1, tile), lambda b, t, invk: (b, 0, t)),
            ],
            out_specs=pl.BlockSpec((None, 4, tile), lambda b, t, invk: (b, 0, t)),
        ),
        compiler_params=pltpu.CompilerParams(
            dimension_semantics=("parallel", "parallel"),
        ),
    )(invk_flat, depth_flat)


def make_pix_coords(batch_size, height, width):
    """Replicates the nn.Parameter setup in __init__ (used by the reference)."""
    xs, ys = np.meshgrid(range(width), range(height), indexing="xy")
    id_coords = np.stack([xs, ys], axis=0).astype(np.float32)        # (2, H, W)
    pix = np.stack([id_coords[0].reshape(-1),
                    id_coords[1].reshape(-1)], axis=0)               # (2, H*W)
    pix = np.broadcast_to(pix[None], (batch_size, 2, height * width))
    ones = np.ones((batch_size, 1, height * width), np.float32)
    return jnp.asarray(np.concatenate([pix, ones], axis=1).astype(np.float32))


def backproject_depth_ref(depth, inv_K):
    """Pure-JAX reference matching the PyTorch forward."""
    B, _, H, W = depth.shape
    HW = H * W
    pix_coords = make_pix_coords(B, H, W)
    cam = jnp.einsum("bij,bjn->bin", inv_K[:, :3, :3], pix_coords)
    cam = depth.reshape(B, 1, HW) * cam
    ones = jnp.ones((B, 1, HW), jnp.float32)
    return jnp.concatenate([cam, ones], axis=1)


if __name__ == "__main__":
    key = jax.random.PRNGKey(0)

    # Primary small test: B=2, H=W=16 (HW = 256).
    for (B, H, W) in [(2, 16, 16), (2, 8, 24)]:
        key, k_depth, k_invk = jax.random.split(key, 3)
        depth = jax.random.uniform(k_depth, (B, 1, H, W), jnp.float32,
                                   minval=0.1, maxval=10.0)
        base = jnp.eye(4, dtype=jnp.float32)[None].repeat(B, axis=0)
        inv_K = base + 0.01 * jax.random.normal(k_invk, (B, 4, 4), jnp.float32)

        out = backproject_depth(depth, inv_K)
        out = jax.block_until_ready(out)

        ref = backproject_depth_ref(depth, inv_K)
        np.testing.assert_allclose(np.asarray(out), np.asarray(ref),
                                   rtol=1e-5, atol=1e-5)

    print("KERNEL_OK")
</pallas_src>

<mosaic_0001>
module attributes {stable_mosaic.version = 11 : i64} {
  func.func @_backproject_kernel(%arg0: i32, %arg1: i32, %arg2: memref<32xf32, #tpu.memory_space<smem>>, %arg3: memref<1x1x256xf32, #tpu.memory_space<vmem>>, %arg4: memref<1x4x256xf32, #tpu.memory_space<vmem>>) attributes {dimension_semantics = [#tpu.dimension_semantics<parallel>, #tpu.dimension_semantics<parallel>], iteration_bounds = array<i64: 2, 1>, scalar_prefetch = 1 : i64, scratch_operands = 0 : i64, tpu.core_type = #tpu.core_type<tc>, window_params = [{transform_indices = @transform_0, window_bounds = array<i64: 1, 1, 256>}, {transform_indices = @transform_1, window_bounds = array<i64: 1, 4, 256>}]} {
    %c16_i32 = arith.constant 16 : i32
    %0 = arith.muli %arg0, %c16_i32 : i32
    %c0_i32 = arith.constant 0 : i32
    %1 = arith.addi %0, %c0_i32 : i32
    %2 = arith.index_cast %1 : i32 to index
    %3 = memref.load %arg2[%2] : memref<32xf32, #tpu.memory_space<smem>>
    %c1_i32 = arith.constant 1 : i32
    %4 = arith.addi %0, %c1_i32 : i32
    %5 = arith.index_cast %4 : i32 to index
    %6 = memref.load %arg2[%5] : memref<32xf32, #tpu.memory_space<smem>>
    %c2_i32 = arith.constant 2 : i32
    %7 = arith.addi %0, %c2_i32 : i32
    %8 = arith.index_cast %7 : i32 to index
    %9 = memref.load %arg2[%8] : memref<32xf32, #tpu.memory_space<smem>>
    %c4_i32 = arith.constant 4 : i32
    %10 = arith.addi %0, %c4_i32 : i32
    %11 = arith.index_cast %10 : i32 to index
    %12 = memref.load %arg2[%11] : memref<32xf32, #tpu.memory_space<smem>>
    %c5_i32 = arith.constant 5 : i32
    %13 = arith.addi %0, %c5_i32 : i32
    %14 = arith.index_cast %13 : i32 to index
    %15 = memref.load %arg2[%14] : memref<32xf32, #tpu.memory_space<smem>>
    %c6_i32 = arith.constant 6 : i32
    %16 = arith.addi %0, %c6_i32 : i32
    %17 = arith.index_cast %16 : i32 to index
    %18 = memref.load %arg2[%17] : memref<32xf32, #tpu.memory_space<smem>>
    %c8_i32 = arith.constant 8 : i32
    %19 = arith.addi %0, %c8_i32 : i32
    %20 = arith.index_cast %19 : i32 to index
    %21 = memref.load %arg2[%20] : memref<32xf32, #tpu.memory_space<smem>>
    %c9_i32 = arith.constant 9 : i32
    %22 = arith.addi %0, %c9_i32 : i32
    %23 = arith.index_cast %22 : i32 to index
    %24 = memref.load %arg2[%23] : memref<32xf32, #tpu.memory_space<smem>>
    %c10_i32 = arith.constant 10 : i32
    %25 = arith.addi %0, %c10_i32 : i32
    %26 = arith.index_cast %25 : i32 to index
    %27 = memref.load %arg2[%26] : memref<32xf32, #tpu.memory_space<smem>>
    %28 = tpu.iota {dimensions = array<i32: 1>} : vector<1x256xi32>
    %29 = arith.sitofp %28 : vector<1x256xi32> to vector<1x256xf32>
    %c256_i32 = arith.constant 256 : i32
    %30 = arith.muli %arg1, %c256_i32 : i32
    %31 = arith.sitofp %30 : i32 to f32
    %32 = vector.broadcast %31 : f32 to vector<1x256xf32>
    %33 = arith.addf %29, %32 : vector<1x256xf32>
    %cst = arith.constant 6.250000e-02 : f32
    %34 = vector.broadcast %cst : f32 to vector<1x256xf32>
    %35 = arith.mulf %33, %34 : vector<1x256xf32>
    %36 = math.floor %35 : vector<1x256xf32>
    %cst_0 = arith.constant 1.600000e+01 : f32
    %37 = vector.broadcast %cst_0 : f32 to vector<1x256xf32>
    %38 = arith.mulf %36, %37 : vector<1x256xf32>
    %39 = arith.subf %33, %38 : vector<1x256xf32>
    %cst_1 = arith.constant 0.000000e+00 : f32
    %40 = vector.broadcast %cst_1 : f32 to vector<1x256xf32>
    %41 = arith.cmpf olt, %39, %40 : vector<1x256xf32>
    %cst_2 = arith.constant 1.000000e+00 : f32
    %42 = vector.broadcast %cst_2 : f32 to vector<1x256xf32>
    %43 = arith.subf %36, %42 : vector<1x256xf32>
    %44 = arith.select %41, %43, %36 : vector<1x256xi1>, vector<1x256xf32>
    %cst_3 = arith.constant 0.000000e+00 : f32
    %45 = vector.broadcast %cst_3 : f32 to vector<1x256xf32>
    %46 = arith.cmpf olt, %39, %45 : vector<1x256xf32>
    %cst_4 = arith.constant 1.600000e+01 : f32
    %47 = vector.broadcast %cst_4 : f32 to vector<1x256xf32>
    %48 = arith.addf %39, %47 : vector<1x256xf32>
    %49 = arith.select %46, %48, %39 : vector<1x256xi1>, vector<1x256xf32>
    %cst_5 = arith.constant 1.600000e+01 : f32
    %50 = vector.broadcast %cst_5 : f32 to vector<1x256xf32>
    %51 = arith.cmpf oge, %49, %50 : vector<1x256xf32>
    %cst_6 = arith.constant 1.000000e+00 : f32
    %52 = vector.broadcast %cst_6 : f32 to vector<1x256xf32>
    %53 = arith.addf %44, %52 : vector<1x256xf32>
    %54 = arith.select %51, %53, %44 : vector<1x256xi1>, vector<1x256xf32>
    %cst_7 = arith.constant 1.600000e+01 : f32
    %55 = vector.broadcast %cst_7 : f32 to vector<1x256xf32>
    %56 = arith.cmpf oge, %49, %55 : vector<1x256xf32>
    %cst_8 = arith.constant 1.600000e+01 : f32
    %57 = vector.broadcast %cst_8 : f32 to vector<1x256xf32>
    %58 = arith.subf %49, %57 : vector<1x256xf32>
    %59 = arith.select %56, %58, %49 : vector<1x256xi1>, vector<1x256xf32>
    %c0 = arith.constant 0 : index
    %c0_9 = arith.constant 0 : index
    %c0_10 = arith.constant 0 : index
    %60 = vector.load %arg3[%c0, %c0_9, %c0_10] : memref<1x1x256xf32, #tpu.memory_space<vmem>>, vector<1x1x256xf32>
    %61 = vector.shape_cast %60 : vector<1x1x256xf32> to vector<1x256xf32>
    %62 = vector.broadcast %3 : f32 to vector<1x256xf32>
    %63 = arith.mulf %62, %59 : vector<1x256xf32>
    %64 = vector.broadcast %6 : f32 to vector<1x256xf32>
    %65 = arith.mulf %64, %54 : vector<1x256xf32>
    %66 = arith.addf %63, %65 : vector<1x256xf32>
    %67 = vector.broadcast %9 : f32 to vector<1x256xf32>
    %68 = arith.addf %66, %67 : vector<1x256xf32>
    %69 = arith.mulf %68, %61 : vector<1x256xf32>
    %c0_11 = arith.constant 0 : index
    %c0_12 = arith.constant 0 : index
    %c0_13 = arith.constant 0 : index
    %70 = vector.load %arg4[%c0_11, %c0_12, %c0_13] : memref<1x4x256xf32, #tpu.memory_space<vmem>>, vector<1x1x256xf32>
    %71 = vector.shape_cast %70 : vector<1x1x256xf32> to vector<1x256xf32>
    %72 = vector.shape_cast %69 : vector<1x256xf32> to vector<1x1x256xf32>
    tpu.vector_store %arg4[%c0_11, %c0_12, %c0_13], %72 {strides = array<i32>} : memref<1x4x256xf32, #tpu.memory_space<vmem>>, vector<1x1x256xf32>,
    %73 = vector.broadcast %12 : f32 to vector<1x256xf32>
    %74 = arith.mulf %73, %59 : vector<1x256xf32>
    %75 = vector.broadcast %15 : f32 to vector<1x256xf32>
    %76 = arith.mulf %75, %54 : vector<1x256xf32>
    %77 = arith.addf %74, %76 : vector<1x256xf32>
    %78 = vector.broadcast %18 : f32 to vector<1x256xf32>
    %79 = arith.addf %77, %78 : vector<1x256xf32>
    %80 = arith.mulf %79, %61 : vector<1x256xf32>
    %c0_14 = arith.constant 0 : index
    %c1 = arith.constant 1 : index
    %c0_15 = arith.constant 0 : index
    %81 = vector.load %arg4[%c0_14, %c1, %c0_15] : memref<1x4x256xf32, #tpu.memory_space<vmem>>, vector<1x1x256xf32>
    %82 = vector.shape_cast %81 : vector<1x1x256xf32> to vector<1x256xf32>
    %83 = vector.shape_cast %80 : vector<1x256xf32> to vector<1x1x256xf32>
    tpu.vector_store %arg4[%c0_14, %c1, %c0_15], %83 {strides = array<i32>} : memref<1x4x256xf32, #tpu.memory_space<vmem>>, vector<1x1x256xf32>,
    %84 = vector.broadcast %21 : f32 to vector<1x256xf32>
    %85 = arith.mulf %84, %59 : vector<1x256xf32>
    %86 = vector.broadcast %24 : f32 to vector<1x256xf32>
    %87 = arith.mulf %86, %54 : vector<1x256xf32>
    %88 = arith.addf %85, %87 : vector<1x256xf32>
    %89 = vector.broadcast %27 : f32 to vector<1x256xf32>
    %90 = arith.addf %88, %89 : vector<1x256xf32>
    %91 = arith.mulf %90, %61 : vector<1x256xf32>
    %c0_16 = arith.constant 0 : index
    %c2 = arith.constant 2 : index
    %c0_17 = arith.constant 0 : index
    %92 = vector.load %arg4[%c0_16, %c2, %c0_17] : memref<1x4x256xf32, #tpu.memory_space<vmem>>, vector<1x1x256xf32>
    %93 = vector.shape_cast %92 : vector<1x1x256xf32> to vector<1x256xf32>
    %94 = vector.shape_cast %91 : vector<1x256xf32> to vector<1x1x256xf32>
    tpu.vector_store %arg4[%c0_16, %c2, %c0_17], %94 {strides = array<i32>} : memref<1x4x256xf32, #tpu.memory_space<vmem>>, vector<1x1x256xf32>,
    %cst_18 = arith.constant 1.000000e+00 : f32
    %95 = vector.broadcast %cst_18 : f32 to vector<1x256xf32>
    %c0_19 = arith.constant 0 : index
    %c3 = arith.constant 3 : index
    %c0_20 = arith.constant 0 : index
    %96 = vector.load %arg4[%c0_19, %c3, %c0_20] : memref<1x4x256xf32, #tpu.memory_space<vmem>>, vector<1x1x256xf32>
    %97 = vector.shape_cast %96 : vector<1x1x256xf32> to vector<1x256xf32>
    %98 = vector.shape_cast %95 : vector<1x256xf32> to vector<1x1x256xf32>
    tpu.vector_store %arg4[%c0_19, %c3, %c0_20], %98 {strides = array<i32>} : memref<1x4x256xf32, #tpu.memory_space<vmem>>, vector<1x1x256xf32>,
    return
  }
  func.func @transform_0(%arg0: i32, %arg1: i32, %arg2: memref<32xf32, #tpu.memory_space<smem>>) -> (i32, i32, i32) {
    %c0_i32 = arith.constant 0 : i32
    %c0_i32_0 = arith.constant 0 : i32
    return %arg0, %c0_i32, %arg1 : i32, i32, i32
  }
  func.func @transform_1(%arg0: i32, %arg1: i32, %arg2: memref<32xf32, #tpu.memory_space<smem>>) -> (i32, i32, i32) {
    %c0_i32 = arith.constant 0 : i32
    %c0_i32_0 = arith.constant 0 : i32
    return %arg0, %c0_i32, %arg1 : i32, i32, i32
  }
}

</mosaic_0001>

<llo_original>
// kernel: tpu_custom_call.1
$region0: #{tpu_custom_call.1}
  #allocation0 [shape = 'u32[]', space=smem, size = 0x4, offset = 0x4, fixed_abs, tag = 'smem constant byte address 0x4 - core index']
  #allocation1 [shape = 'u32[144,128]{1,0:T(1,128)}', space=vmem, size = 0x12000, scoped, tag = 'internal scratch']
  #allocation2 [shape = 's32[1]{0}', space=sflag, size = 0x4, scoped, tag = 'scoped memory for tpu_custom_call.1']
  #allocation3 [shape = 'u8[512]{0}', space=smem, size = 0x200, scoped, tag = 'prefetched SMEM operand 0']
  %s0 = inlined_call_operand.hbm [shape: f32[32], index: 0, kind: input, shape index: {}]
  %s1 = inlined_call_operand.hbm [shape: f32[2,1,256], index: 1, kind: input, shape index: {}]
  %s2 = inlined_call_operand.hbm [shape: f32[2,4,256], index: 2, kind: output, shape index: {}]
  %s3 = sld [smem:[#allocation0]]
  $region41: #{tpu_custom_call.1} parent=0
    _
  %s5 = ssub.s32 1, %s3
  %s6 = scalar_select 0, %s5, %s3
  %8 = dma.hbm_to_smem %s0, 16, [#allocation3], [#allocation2]
  %9 = dma.done [#allocation2], 16
  %10 = sfence
  $region1: #{tpu_custom_call.1} parent=0
    #allocation4 [shape = 'u8[2048]{0}', space=vmem, size = 0x800, scoped, tag = 'input window, operand 1']
    #allocation5 [shape = 's32[2]{0}', space=sflag, size = 0x8, scoped, tag = 'scoped memory for tpu_custom_call.1']
    #allocation6 [shape = 's32[2]{0}', space=sflag, size = 0x8, scoped, tag = 'scoped memory for tpu_custom_call.1']
    #allocation7 [shape = 'u8[8192]{0}', space=vmem, size = 0x2000, scoped, tag = 'output window, operand 0']
    %11 = vsyncpa [#allocation5], 0
    %s12 = scalar_lea.sflag [#allocation5], 1
    %13 = vsyncpa %s12, 0
    %14 = vsyncpa [#allocation6], 0
    %s15 = scalar_lea.sflag [#allocation6], 1
    %16 = vsyncpa %s15, 0
    loop: start=0, step=1, limit=4
    $region2: #{tpu_custom_call.1} parent=1 // loop_pre_header
      _
    $region3: #{tpu_custom_call.1} parent=1 // loop_header
      %s18 = sphi 0, %s22
      %p19 = scmp.ge.s32.totalorder %s18, 4
      %s25 = sphi 0, %s37
      %s26 = sphi 0, %s33
      %s27 = sphi 0, %s25
      %s28 = sphi 0, %s26
      %s29 = sphi 0, %s27
      %s30 = sphi 0, %s28
      %s42 = sphi 0, %s44
      %s45 = sphi 0, %s42
      %s46 = sphi 0, %s45
      %s62 = sphi 0, %s46
      %s70 = sphi 0, %s72
      %s73 = sphi 0, %s70
      %s74 = sphi 0, %s73
      %s90 = sphi 0, %s74
    $region4: #{tpu_custom_call.1} parent=1 // loop_header_branch
      %21 = sbr.rel (%p19) target = $region8
    $region5: #{tpu_custom_call.1} parent=1 // loop_body
      %s23 = ssub.s32 %s18, 1
      %s24 = ssub.s32 %s18, 2
      %s31 = sadd.s32 1, %s26
      %p32 = scmp.ge.s32.totalorder %s31, 1
      %s33 = scalar_select %p32, 0, %s31
      %s34 = sadd.s32 1, %s25
      %s35 = scalar_select %p32, %s34, %s25
      %p36 = scmp.ge.s32.totalorder %s35, 2
      %s37 = scalar_select %p36, 0, %s35
      %s38 = ssub.s32 %s25, %s37
      %s39 = ssub.s32 %s26, %s33
      %s40 = sor.u32 %s38, %s39
      %p41 = scmp.eq.s32.totalorder %s40, 0
      %s43 = sadd.s32 %s42, 1
      %s44 = scalar_select %p41, %s42, %s43
      %p47 = pneg %p41
      %p48 = scmp.eq.s32.totalorder %s18, 1
      %p49 = por %p47, %p48
      %p50 = scmp.ne.s32.totalorder %s42, %s45
      %p51 = scmp.eq.s32.totalorder %s18, 0
      %p52 = por %p50, %p51
      %p53 = scmp.ne.s32.totalorder %s42, %s45
      %p54 = scmp.eq.s32.totalorder %s23, 1
      %p55 = por %p53, %p54
      %p56 = scmp.ne.s32.totalorder %s45, %s46
      %p57 = scmp.eq.s32.totalorder %s23, 0
      %p58 = por %p56, %p57
      %p59 = scmp.ne.s32.totalorder %s45, %s46
      %p60 = scmp.eq.s32.totalorder %s24, 1
      %p61 = por %p59, %p60
      %p63 = scmp.ne.s32.totalorder %s46, %s62
      %p64 = scmp.eq.s32.totalorder %s24, 0
      %p65 = por %p63, %p64
      %s66 = ssub.s32 %s25, %s37
      %s67 = ssub.s32 %s26, %s33
      %s68 = sor.u32 %s66, %s67
      %p69 = scmp.eq.s32.totalorder %s68, 0
      %s71 = sadd.s32 %s70, 1
      %s72 = scalar_select %p69, %s70, %s71
      %p75 = pneg %p69
      %p76 = scmp.eq.s32.totalorder %s18, 1
      %p77 = por %p75, %p76
      %p78 = scmp.ne.s32.totalorder %s70, %s73
      %p79 = scmp.eq.s32.totalorder %s18, 0
      %p80 = por %p78, %p79
      %p81 = scmp.ne.s32.totalorder %s70, %s73
      %p82 = scmp.eq.s32.totalorder %s23, 1
      %p83 = por %p81, %p82
      %p84 = scmp.ne.s32.totalorder %s73, %s74
      %p85 = scmp.eq.s32.totalorder %s23, 0
      %p86 = por %p84, %p85
      %p87 = scmp.ne.s32.totalorder %s73, %s74
      %p88 = scmp.eq.s32.totalorder %s24, 1
      %p89 = por %p87, %p88
      %p91 = scmp.ne.s32.totalorder %s74, %s90
      %p92 = scmp.eq.s32.totalorder %s24, 0
      %p93 = por %p91, %p92
      %p94 = scmp.le.s32.totalorder 1, %s18
      %p95 = scmp.lt.s32.totalorder %s18, 3
      %p96 = pnand %p94, %p95
      %p97 = pneg %p96
      // Predicated region
      $region9: #{tpu_custom_call.1} parent=5 // pred_check
        _
      $region10: #{tpu_custom_call.1} parent=5 // pred_check_branch
        %99 = sbr.rel (%p96) target = $region12
      $region11: #{tpu_custom_call.1} parent=5 // pred_region
        %s100 = ssub.s32 %s18, 1
      $region12: #{tpu_custom_call.1} parent=5 // pred_fallthru
        _
      %p101 = scmp.lt.s32.totalorder %s18, 2
      // Predicated region
      $region13: #{tpu_custom_call.1} parent=5 // pred_check
        %p102 = pneg %p101
      $region14: #{tpu_custom_call.1} parent=5 // pred_check_branch
        %104 = sbr.rel (%p102) target = $region16
      $region15: #{tpu_custom_call.1} parent=5 // pred_region
        // Predicated region
        $region17: #{tpu_custom_call.1} parent=15 // pred_check
          %p105 = pneg %p52
        $region18: #{tpu_custom_call.1} parent=15 // pred_check_branch
          %107 = sbr.rel (%p105) target = $region20
        $region19: #{tpu_custom_call.1} parent=15 // pred_region
          %s108 = sand.u32 %s42, 1
          %s109 = scalar_lea.sflag [#allocation5], %s108
          %s110 = sand.u32 %s42, 1
          %s111 = smul.addr %s110, 2
          %s112 = scalar_lea.vmem [#allocation4], %s111
          %s113 = smul.u32 2, %s26
          %s115 = ssub.s32 32, 32
          %116 = vsyncadd %s109, %s115
          %s117 = smul.addr %s25, 2
          %s118 = sadd.s32 %s113, %s117
          %s119 = smul.addr %s118, 16
          %s120 = scalar_lea.hbm %s1, %s119
          %s122 = sshll.u32 %s112, 4
          %s123 = int_to_ptr.vmem [resolvable:$true] %s122
          %125 = dma.hbm_to_vmem [thread:$0]  %s120, 32, %s123, %s109
        $region20: #{tpu_custom_call.1} parent=15 // pred_fallthru
          _
      $region16: #{tpu_custom_call.1} parent=5 // pred_fallthru
        _
      %p126 = scmp.le.s32.totalorder 1, %s18
      %p127 = scmp.lt.s32.totalorder %s18, 3
      %p128 = pnand %p126, %p127
      %p129 = pneg %p128
      // Predicated region
      $region21: #{tpu_custom_call.1} parent=5 // pred_check
        _
      $region22: #{tpu_custom_call.1} parent=5 // pred_check_branch
        %131 = sbr.rel (%p128) target = $region24
      $region23: #{tpu_custom_call.1} parent=5 // pred_region
        %s132 = ssub.s32 %s18, 1
        %s133 = sand.u32 %s45, 1
        %s134 = scalar_lea.sflag [#allocation5], %s133
        %s135 = sand.u32 %s45, 1
        %s136 = smul.addr %s135, 2
        %s137 = scalar_lea.vmem [#allocation4], %s136
        // Predicated region
        $region25: #{tpu_custom_call.1} parent=23 // pred_check
          %p138 = pneg %p58
        $region26: #{tpu_custom_call.1} parent=23 // pred_check_branch
          %140 = sbr.rel (%p138) target = $region28
        $region27: #{tpu_custom_call.1} parent=23 // pred_region
          %141 = dma.done %s134, 32
        $region28: #{tpu_custom_call.1} parent=23 // pred_fallthru
          _
        %s142 = sand.u32 %s45, 1
        %s143 = scalar_lea.sflag [#allocation5], %s142
        %s144 = sand.u32 %s45, 1
        %s145 = smul.addr %s144, 2
        %s146 = scalar_lea.vmem [#allocation4], %s145
        %p147 = pneg %p58
        %p148 = pneg %p55
        %p149 = pneg %p86
        %p150 = pneg %p83
        %s151 = sand.u32 %s73, 1
        %s152 = scalar_lea.sflag [#allocation6], %s151
        %s153 = sand.u32 %s73, 1
        %s154 = smul.addr %s153, 8
        %s155 = scalar_lea.vmem [#allocation7], %s154
        %s156 = smul.u32 2, %s28
        %s157 = smul.u32 2, %s28
        %s158 = smul.u32 %s27, 16
        %s159 = sld [smem:[#allocation3 + %s158]]
        %s160 = sadd.s32 %s158, 1
        %s161 = sld [smem:[#allocation3 + %s160]]
        %s162 = sadd.s32 %s158, 2
        %s163 = sld [smem:[#allocation3 + %s162]]
        %s164 = sadd.s32 %s158, 4
        %s165 = sld [smem:[#allocation3 + %s164]]
        %s166 = sadd.s32 %s158, 5
        %s167 = sld [smem:[#allocation3 + %s166]]
        %s168 = sadd.s32 %s158, 6
        %s169 = sld [smem:[#allocation3 + %s168]]
        %s170 = sadd.s32 %s158, 8
        %s171 = sld [smem:[#allocation3 + %s170]]
        %s172 = sadd.s32 %s158, 9
        %s173 = sld [smem:[#allocation3 + %s172]]
        %s174 = sadd.s32 %s158, 10
        %s175 = sld [smem:[#allocation3 + %s174]]
        %v176 = vlaneseq
        %v177 = vand.u32 %v176, 127
        %v178 = vadd.s32 %v177, 128
        %v179 = vcvt.s32.f32 %v177
        %v180 = vcvt.s32.f32 %v178
        %s181 = smul.u32 %s28, 256
        %s182 = scvt.s32.f32 %s181
        %v183 = vstv %s182
        %v184 = vadd.f32 %v179, %v183
        %v185 = vadd.f32 %v180, %v183
        %v186 = vmul.f32 %v184, 0.0625
        %v187 = vmul.f32 %v185, 0.0625
        %v188 = vfloor.f32 %v186
        %v189 = vfloor.f32 %v187
        %v190 = vmul.f32 %v188, 16.0
        %v191 = vmul.f32 %v189, 16.0
        %v192 = vsub.f32 %v184, %v190
        %v193 = vsub.f32 %v185, %v191
        %vm194 = vcmp.lt.f32.partialorder %v192, 0.0
        %vm195 = vcmp.lt.f32.partialorder %v193, 0.0
        %v196 = vsub.f32 %v188, 1.0
        %v197 = vsub.f32 %v189, 1.0
        %v198 = vsel %vm194, %v196, %v188
        %v199 = vsel %vm195, %v197, %v189
        %v200 = vadd.f32 %v192, 16.0
        %v201 = vadd.f32 %v193, 16.0
        %v202 = vsel %vm194, %v200, %v192
        %v203 = vsel %vm195, %v201, %v193
        %vm204 = vcmp.ge.f32.partialorder %v202, 16.0
        %vm205 = vcmp.ge.f32.partialorder %v203, 16.0
        %v206 = vadd.f32 %v198, 1.0
        %v207 = vadd.f32 %v199, 1.0
        %v208 = vsel %vm204, %v206, %v198
        %v209 = vsel %vm205, %v207, %v199
        %v210 = vsub.f32 %v202, 16.0
        %v211 = vsub.f32 %v203, 16.0
        %v212 = vsel %vm204, %v210, %v202
        %v213 = vsel %vm205, %v211, %v203
        %v214 = vld [vmem:[%s137] sm:$0x3]
        %v215 = vstv %s159
        %v216 = vmul.f32 %v215, %v212
        %v217 = vmul.f32 %v215, %v213
        %v218 = vstv %s161
        %v219 = vmul.f32 %v218, %v208
        %v220 = vmul.f32 %v218, %v209
        %v221 = vadd.f32 %v216, %v219
        %v222 = vadd.f32 %v217, %v220
        %v223 = vstv %s163
        %v224 = vadd.f32 %v221, %v223
        %v225 = vadd.f32 %v222, %v223
        %v227 = vlaneseq
        %v228 = vshrl.u32 %v227, 7
        %v229 = vsub.s32 0, %v228
        %v230 = vrot.slane %v214, %v229
        %v231 = vlaneseq
        %v232 = vshrl.u32 %v231, 7
        %v233 = vsub.s32 1, %v232
        %v234 = vrot.slane %v214, %v233
        %v237 = vmul.f32 %v224, %v230
        %v238 = vmul.f32 %v225, %v234
        %v241 = vcombine.low %v237, %v238
        %v243 = vunpack.c.l.s4 1966171168
        %v244 = vunpack.c.0.s8 %v243
        %v245 = vlaneseq
        %v246 = vshrl.u32 %v245, 7
        %v247 = vsub.s32 %v244, %v246
        %v248 = vrot.slane %v241, %v247
        %v250 = vunpack.c.l.s4 1966171168
        %v251 = vunpack.c.0.s8 %v250
        %v252 = vlaneseq
        %v253 = vshrl.u32 %v252, 7
        %v254 = vsub.s32 %v251, %v253
        %v255 = vrot.slane %v248, %v254
        %v257 = vlaneseq
        %vm258 = vcmp.ge.s32.totalorder %v257, 0
        %vm259 = vcmp.lt.s32.totalorder %v257, 256
        %vm260 = vmand %vm258, %vm259
        %261 = vst.msk [vmem:[%s155] ss:$4 sm:$0x3] %vm260, %v255
        %v262 = vstv %s165
        %v263 = vmul.f32 %v262, %v212
        %v264 = vmul.f32 %v262, %v213
        %v265 = vstv %s167
        %v266 = vmul.f32 %v265, %v208
        %v267 = vmul.f32 %v265, %v209
        %v268 = vadd.f32 %v263, %v266
        %v269 = vadd.f32 %v264, %v267
        %v270 = vstv %s169
        %v271 = vadd.f32 %v268, %v270
        %v272 = vadd.f32 %v269, %v270
        %v273 = vmul.f32 %v271, %v230
        %v274 = vmul.f32 %v272, %v234
        %v277 = vcombine.low %v273, %v274
        %v279 = vunpack.c.l.s4 1966171168
        %v280 = vunpack.c.0.s8 %v279
        %v281 = vlaneseq
        %v282 = vshrl.u32 %v281, 7
        %v283 = vsub.s32 %v280, %v282
        %v284 = vrot.slane %v277, %v283
        %v286 = vunpack.c.l.s4 1966171168
        %v287 = vunpack.c.0.s8 %v286
        %v288 = vlaneseq
        %v289 = vshrl.u32 %v288, 7
        %v290 = vsub.s32 %v287, %v289
        %v291 = vrot.slane %v284, %v290
        %s293 = scalar_lea.vmem %s155, 1 [#allocation7]
        %294 = vst.msk [vmem:[%s293] ss:$4 sm:$0x3] %vm260, %v291
        %v295 = vstv %s171
        %v296 = vmul.f32 %v295, %v212
        %v297 = vmul.f32 %v295, %v213
        %v298 = vstv %s173
        %v299 = vmul.f32 %v298, %v208
        %v300 = vmul.f32 %v298, %v209
        %v301 = vadd.f32 %v296, %v299
        %v302 = vadd.f32 %v297, %v300
        %v303 = vstv %s175
        %v304 = vadd.f32 %v301, %v303
        %v305 = vadd.f32 %v302, %v303
        %v306 = vmul.f32 %v304, %v230
        %v307 = vmul.f32 %v305, %v234
        %v310 = vcombine.low %v306, %v307
        %v312 = vunpack.c.l.s4 1966171168
        %v313 = vunpack.c.0.s8 %v312
        %v314 = vlaneseq
        %v315 = vshrl.u32 %v314, 7
        %v316 = vsub.s32 %v313, %v315
        %v317 = vrot.slane %v310, %v316
        %v319 = vunpack.c.l.s4 1966171168
        %v320 = vunpack.c.0.s8 %v319
        %v321 = vlaneseq
        %v322 = vshrl.u32 %v321, 7
        %v323 = vsub.s32 %v320, %v322
        %v324 = vrot.slane %v317, %v323
        %s326 = scalar_lea.vmem %s155, 2 [#allocation7]
        %327 = vst.msk [vmem:[%s326] ss:$4 sm:$0x3] %vm260, %v324
        %s328 = scalar_lea.vmem %s155, 3 [#allocation7]
        %329 = vst.msk [vmem:[%s328] ss:$4 sm:$0x3] %vm260, 1.0
        %s330 = sand.u32 %s73, 1
        %s331 = scalar_lea.sflag [#allocation6], %s330
        %s332 = sand.u32 %s73, 1
        %s333 = smul.addr %s332, 8
        %s334 = scalar_lea.vmem [#allocation7], %s333
        // Predicated region
        $region29: #{tpu_custom_call.1} parent=23 // pred_check
          %p335 = pneg %p83
        $region30: #{tpu_custom_call.1} parent=23 // pred_check_branch
          %337 = sbr.rel (%p335) target = $region32
        $region31: #{tpu_custom_call.1} parent=23 // pred_region
          %s338 = smul.u32 2, %s28
          %s340 = ssub.s32 128, 128
          %341 = vsyncadd %s331, %s340
          %s342 = smul.addr %s27, 2
          %s343 = sadd.s32 %s338, %s342
          %s344 = smul.addr %s343, 64
          %s345 = scalar_lea.hbm %s2, %s344
          %s347 = sshll.u32 %s334, 4
          %s348 = int_to_ptr.vmem [resolvable:$true] %s347
          %350 = dma.vmem_to_hbm [thread:$0]  %s348, 128, %s345, %s331
        $region32: #{tpu_custom_call.1} parent=23 // pred_fallthru
          _
      $region24: #{tpu_custom_call.1} parent=5 // pred_fallthru
        _
      %p351 = scmp.le.s32.totalorder 2, %s18
      // Predicated region
      $region33: #{tpu_custom_call.1} parent=5 // pred_check
        %p352 = pneg %p351
      $region34: #{tpu_custom_call.1} parent=5 // pred_check_branch
        %354 = sbr.rel (%p352) target = $region36
      $region35: #{tpu_custom_call.1} parent=5 // pred_region
        %s355 = ssub.s32 %s18, 2
        // Predicated region
        $region37: #{tpu_custom_call.1} parent=35 // pred_check
          %p356 = pneg %p89
        $region38: #{tpu_custom_call.1} parent=35 // pred_check_branch
          %358 = sbr.rel (%p356) target = $region40
        $region39: #{tpu_custom_call.1} parent=35 // pred_region
          %s359 = sand.u32 %s74, 1
          %s360 = scalar_lea.sflag [#allocation6], %s359
          %s361 = sand.u32 %s74, 1
          %s362 = smul.addr %s361, 8
          %s363 = scalar_lea.vmem [#allocation7], %s362
          %364 = dma.done %s360, 128
        $region40: #{tpu_custom_call.1} parent=35 // pred_fallthru
          _
      $region36: #{tpu_custom_call.1} parent=5 // pred_fallthru
        _
    $region6: #{tpu_custom_call.1} parent=1 // loop_footer
      %s22 = sadd.s32 1, %s18
    $region7: #{tpu_custom_call.1} parent=1 // loop_footer_branch
      %17 = sbr.rel target = $region3
    $region8: #{tpu_custom_call.1} parent=1 // loop_exit
      _
    %365 = vsyncpa [#allocation5], 1
    %s366 = scalar_lea.sflag [#allocation5], 1
    %367 = vsyncpa %s366, 1
    %368 = vsyncpa [#allocation6], 1
    %s369 = scalar_lea.sflag [#allocation6], 1
    %370 = vsyncpa %s369, 1

</llo_original>
